<compile_context>
chip_gen: v7x
topology: tpu7x:2x2x1
jax: 0.10.0
libtpu: 0.0.40
codegen_flags: <defaults>
</compile_context>

<pallas_src>
import numpy as np
import jax
import jax.numpy as jnp
from jax import lax
from jax.experimental import pallas as pl
from jax.experimental.pallas import tpu as pltpu

LANE = 128
ROW_GROUP = 8            # sublane height of one vreg / of the accumulator
MAX_ROW_TILE = 8192      # (8192, 128) f32 = 4 MiB per pipeline buffer
NUM_CORES = 2            # v7x has 2 TensorCores; harmless split on v5e/v6e
VMEM_LIMIT_BYTES = 40 * 1024 * 1024   # 2 inputs x 2 bufs x 4 MiB (f32) + slack


def _cdiv(a, b):
    return -(-a // b)


def _round_up(a, b):
    return _cdiv(a, b) * b


def _make_kernel(is_angle, period, rows, row_tile):
    groups = row_tile // ROW_GROUP

    def kernel(x_ref, t_ref, o_ref, acc_ref):
        j = pl.program_id(1)

        @pl.when(j == 0)
        def _():
            acc_ref[...] = jnp.zeros_like(acc_ref)

        # Logical row offset of this tile in the flattened (rows, 128) view.
        tile_idx = pl.program_id(0) * pl.num_programs(1) + j
        row_start = tile_idx * row_tile

        x = x_ref[...].astype(jnp.float32)
        t = t_ref[...].astype(jnp.float32)
        d = jnp.abs(x - t)
        if is_angle:
            d = jnp.minimum(d, jnp.float32(period) - d)

        # Only tail / phantom tiles (at most one per core) can reach past the
        # real array; interior tiles skip the iota/compare/select entirely so
        # the per-vreg VPU work stays well under the HBM time on every chip.
        needs_mask = row_start + row_tile > rows

        @pl.when(jnp.logical_not(needs_mask))
        def _():
            # Lane-parallel partial sum: fold the tile down to (8, 128) with
            # pure VPU adds; the one cross-lane reduce happens in the wrapper.
            acc_ref[...] += jnp.sum(d.reshape(groups, ROW_GROUP, LANE), axis=0)

        @pl.when(needs_mask)
        def _():
            # valid <= 0 on phantom tiles (core-split remainder) -> all masked.
            # The <=127-element lane pad is explicit zeros, which contribute 0
            # to both loss branches, so only whole rows need masking here.
            valid = rows - row_start
            row_ids = lax.broadcasted_iota(jnp.int32, (row_tile, LANE), 0)
            dm = jnp.where(row_ids < valid, d, 0.0)
            acc_ref[...] += jnp.sum(dm.reshape(groups, ROW_GROUP, LANE), axis=0)

        @pl.when(j == pl.num_programs(1) - 1)
        def _():
            o_ref[...] = acc_ref[...]

    return kernel


def mae_loss(inp, target, is_angle=True, deg=True):
    """Pallas equivalent of MAELoss.forward(input, target, is_angle, deg)."""
    assert inp.shape == target.shape
    n = int(np.prod(inp.shape))
    period = 360.0 if deg else 2.0 * np.pi

    xf = inp.reshape(-1)
    tf = target.reshape(-1)

    # Pad only up to a multiple of the 128-lane width (<= 127 zeros); a zero
    # diff contributes zero loss in both branches.
    pad = (-n) % LANE
    if pad:
        xf = jnp.pad(xf, (0, pad))
        tf = jnp.pad(tf, (0, pad))

    rows = (n + pad) // LANE
    x2 = xf.reshape(rows, LANE)
    t2 = tf.reshape(rows, LANE)

    row_tile = min(MAX_ROW_TILE, _round_up(rows, ROW_GROUP))
    num_tiles = _cdiv(rows, row_tile)
    steps_per_core = _cdiv(num_tiles, NUM_CORES)

    def in_index_map(i, j):
        # Clamp phantom tiles (core-split remainder) onto the last real tile;
        # their contribution is masked to zero inside the kernel.
        return (jnp.minimum(i * steps_per_core + j, num_tiles - 1), 0)

    kernel = _make_kernel(is_angle, period, rows, row_tile)

    partials = pl.pallas_call(
        kernel,
        out_shape=jax.ShapeDtypeStruct((NUM_CORES * ROW_GROUP, LANE), jnp.float32),
        grid_spec=pltpu.PrefetchScalarGridSpec(
            num_scalar_prefetch=0,
            grid=(NUM_CORES, steps_per_core),
            in_specs=[
                pl.BlockSpec((row_tile, LANE), in_index_map),
                pl.BlockSpec((row_tile, LANE), in_index_map),
            ],
            out_specs=pl.BlockSpec((ROW_GROUP, LANE), lambda i, j: (i, 0)),
            scratch_shapes=[pltpu.VMEM((ROW_GROUP, LANE), jnp.float32)],
        ),
        compiler_params=pltpu.CompilerParams(
            dimension_semantics=("parallel", "arbitrary"),
            vmem_limit_bytes=VMEM_LIMIT_BYTES,
        ),
    )(x2, t2)

    return jnp.sum(partials) / jnp.float32(n)


def _reference(inp, target, is_angle=True, deg=True):
    d = jnp.abs(inp.astype(jnp.float32) - target.astype(jnp.float32))
    if is_angle:
        p = 360.0 if deg else 2.0 * np.pi
        d = jnp.minimum(d, p - d)
    return jnp.mean(d)


if __name__ == "__main__":
    key = jax.random.PRNGKey(0)
    k1, k2 = jax.random.split(key)
    # Angles in degrees, NCHW-shaped like a dense prediction task.
    x = jax.random.uniform(k1, (2, 4, 16, 16), jnp.float32, -180.0, 180.0)
    t = jax.random.uniform(k2, (2, 4, 16, 16), jnp.float32, -180.0, 180.0)

    # is_angle=True, deg=True (default forward path)
    out = jax.block_until_ready(mae_loss(x, t, is_angle=True, deg=True))
    ref = _reference(x, t, is_angle=True, deg=True)
    assert np.allclose(np.asarray(out), np.asarray(ref), rtol=1e-5, atol=1e-5)

    # is_angle=False branch (plain MAE)
    out2 = jax.block_until_ready(mae_loss(x, t, is_angle=False))
    ref2 = _reference(x, t, is_angle=False)
    assert np.allclose(np.asarray(out2), np.asarray(ref2), rtol=1e-5, atol=1e-5)

    # Ragged, non-128-aligned shape in bf16 (radians): exercises the in-kernel
    # tail masking and the in-kernel widening path.
    k3, k4 = jax.random.split(k1)
    xr = jax.random.uniform(k3, (2, 3, 11, 7), jnp.float32, -np.pi, np.pi)
    tr = jax.random.uniform(k4, (2, 3, 11, 7), jnp.float32, -np.pi, np.pi)
    xb, tb = xr.astype(jnp.bfloat16), tr.astype(jnp.bfloat16)
    out3 = jax.block_until_ready(mae_loss(xb, tb, is_angle=True, deg=False))
    ref3 = _reference(xb, tb, is_angle=True, deg=False)
    assert np.allclose(np.asarray(out3), np.asarray(ref3), rtol=1e-4, atol=1e-4)

    # Larger tensor: exercises the multi-tile streaming + 2-core split path.
    k5, k6 = jax.random.split(k2)
    xl = jax.random.uniform(k5, (4, 8, 64, 96), jnp.float32, -180.0, 180.0)
    tl = jax.random.uniform(k6, (4, 8, 64, 96), jnp.float32, -180.0, 180.0)
    out4 = jax.block_until_ready(mae_loss(xl, tl, is_angle=True, deg=True))
    ref4 = _reference(xl, tl, is_angle=True, deg=True)
    assert np.allclose(np.asarray(out4), np.asarray(ref4), rtol=1e-5, atol=1e-5)

    print("KERNEL_OK")
</pallas_src>

<mosaic_0001>
module attributes {stable_mosaic.version = 11 : i64} {
  func.func @kernel(%arg0: i32, %arg1: i32, %arg2: memref<16x128xf32, #tpu.memory_space<vmem>>, %arg3: memref<16x128xf32, #tpu.memory_space<vmem>>, %arg4: memref<8x128xf32, #tpu.memory_space<vmem>>, %arg5: memref<8x128xf32, #tpu.memory_space<vmem>>) attributes {dimension_semantics = [#tpu.dimension_semantics<parallel>, #tpu.dimension_semantics<arbitrary>], iteration_bounds = array<i64: 2, 1>, scalar_prefetch = 0 : i64, scratch_operands = 1 : i64, tpu.core_type = #tpu.core_type<tc>, window_params = [{transform_indices = @transform_0, window_bounds = array<i64: 16, 128>}, {transform_indices = @transform_1, window_bounds = array<i64: 16, 128>}, {transform_indices = @transform_2, window_bounds = array<i64: 8, 128>}]} {
    %c0_i32 = arith.constant 0 : i32
    %0 = arith.cmpi eq, %arg1, %c0_i32 : i32
    %1 = arith.extui %0 : i1 to i32
    %c0_i32_0 = arith.constant 0 : i32
    %2 = arith.cmpi ne, %1, %c0_i32_0 : i32
    scf.if %2 {
      %cst_10 = arith.constant 0.000000e+00 : f32
      %23 = vector.broadcast %cst_10 : f32 to vector<8x128xf32>
      %c0_11 = arith.constant 0 : index
      %c0_12 = arith.constant 0 : index
      %24 = vector.load %arg5[%c0_11, %c0_12] : memref<8x128xf32, #tpu.memory_space<vmem>>, vector<8x128xf32>
      tpu.vector_store %arg5[%c0_11, %c0_12], %23 {strides = array<i32>} : memref<8x128xf32, #tpu.memory_space<vmem>>, vector<8x128xf32>,
    } else {
    }
    %c1_i32 = arith.constant 1 : i32
    %3 = arith.muli %arg0, %c1_i32 : i32
    %4 = arith.addi %3, %arg1 : i32
    %c16_i32 = arith.constant 16 : i32
    %5 = arith.muli %4, %c16_i32 : i32
    %c0 = arith.constant 0 : index
    %c0_1 = arith.constant 0 : index
    %6 = vector.load %arg2[%c0, %c0_1] : memref<16x128xf32, #tpu.memory_space<vmem>>, vector<16x128xf32>
    %c0_2 = arith.constant 0 : index
    %c0_3 = arith.constant 0 : index
    %7 = vector.load %arg3[%c0_2, %c0_3] : memref<16x128xf32, #tpu.memory_space<vmem>>, vector<16x128xf32>
    %8 = arith.subf %6, %7 : vector<16x128xf32>
    %9 = math.absf %8 : vector<16x128xf32>
    %cst = arith.constant 3.600000e+02 : f32
    %10 = vector.broadcast %cst : f32 to vector<16x128xf32>
    %11 = arith.subf %10, %9 : vector<16x128xf32>
    %12 = arith.minimumf %9, %11 : vector<16x128xf32>
    %c16_i32_4 = arith.constant 16 : i32
    %13 = arith.addi %5, %c16_i32_4 : i32
    %c16_i32_5 = arith.constant 16 : i32
    %14 = arith.cmpi sgt, %13, %c16_i32_5 : i32
    %true = arith.constant true
    %15 = arith.xori %14, %true : i1
    %16 = arith.extui %15 : i1 to i32
    %c0_i32_6 = arith.constant 0 : i32
    %17 = arith.cmpi ne, %16, %c0_i32_6 : i32
    scf.if %17 {
      %c0_10 = arith.constant 0 : index
      %c0_11 = arith.constant 0 : index
      %23 = vector.load %arg5[%c0_10, %c0_11] : memref<8x128xf32, #tpu.memory_space<vmem>>, vector<8x128xf32>
      %24 = vector.shape_cast %12 : vector<16x128xf32> to vector<2x8x128xf32>
      %cst_12 = arith.constant dense<0.000000e+00> : vector<8x128xf32>
      %25 = vector.multi_reduction <add>, %24, %cst_12 [0] : vector<2x8x128xf32> to vector<8x128xf32>
      %26 = arith.addf %23, %25 : vector<8x128xf32>
      %c0_13 = arith.constant 0 : index
      %c0_14 = arith.constant 0 : index
      %27 = vector.load %arg5[%c0_13, %c0_14] : memref<8x128xf32, #tpu.memory_space<vmem>>, vector<8x128xf32>
      tpu.vector_store %arg5[%c0_13, %c0_14], %26 {strides = array<i32>} : memref<8x128xf32, #tpu.memory_space<vmem>>, vector<8x128xf32>,
    } else {
    }
    %18 = arith.extui %14 : i1 to i32
    %c0_i32_7 = arith.constant 0 : i32
    %19 = arith.cmpi ne, %18, %c0_i32_7 : i32
    scf.if %19 {
      %c16_i32_10 = arith.constant 16 : i32
      %23 = arith.subi %c16_i32_10, %5 : i32
      %24 = tpu.iota {dimensions = array<i32: 0>} : vector<16x128xi32>
      %25 = vector.broadcast %23 : i32 to vector<16x128xi32>
      %26 = arith.cmpi slt, %24, %25 : vector<16x128xi32>
      %cst_11 = arith.constant 0.000000e+00 : f32
      %27 = vector.broadcast %cst_11 : f32 to vector<16x128xf32>
      %28 = arith.select %26, %12, %27 : vector<16x128xi1>, vector<16x128xf32>
      %c0_12 = arith.constant 0 : index
      %c0_13 = arith.constant 0 : index
      %29 = vector.load %arg5[%c0_12, %c0_13] : memref<8x128xf32, #tpu.memory_space<vmem>>, vector<8x128xf32>
      %30 = vector.shape_cast %28 : vector<16x128xf32> to vector<2x8x128xf32>
      %cst_14 = arith.constant dense<0.000000e+00> : vector<8x128xf32>
      %31 = vector.multi_reduction <add>, %30, %cst_14 [0] : vector<2x8x128xf32> to vector<8x128xf32>
      %32 = arith.addf %29, %31 : vector<8x128xf32>
      %c0_15 = arith.constant 0 : index
      %c0_16 = arith.constant 0 : index
      %33 = vector.load %arg5[%c0_15, %c0_16] : memref<8x128xf32, #tpu.memory_space<vmem>>, vector<8x128xf32>
      tpu.vector_store %arg5[%c0_15, %c0_16], %32 {strides = array<i32>} : memref<8x128xf32, #tpu.memory_space<vmem>>, vector<8x128xf32>,
    } else {
    }
    %c0_i32_8 = arith.constant 0 : i32
    %20 = arith.cmpi eq, %arg1, %c0_i32_8 : i32
    %21 = arith.extui %20 : i1 to i32
    %c0_i32_9 = arith.constant 0 : i32
    %22 = arith.cmpi ne, %21, %c0_i32_9 : i32
    scf.if %22 {
      %c0_10 = arith.constant 0 : index
      %c0_11 = arith.constant 0 : index
      %23 = vector.load %arg5[%c0_10, %c0_11] : memref<8x128xf32, #tpu.memory_space<vmem>>, vector<8x128xf32>
      %c0_12 = arith.constant 0 : index
      %c0_13 = arith.constant 0 : index
      %24 = vector.load %arg4[%c0_12, %c0_13] : memref<8x128xf32, #tpu.memory_space<vmem>>, vector<8x128xf32>
      tpu.vector_store %arg4[%c0_12, %c0_13], %23 {strides = array<i32>} : memref<8x128xf32, #tpu.memory_space<vmem>>, vector<8x128xf32>,
    } else {
    }
    return
  }
  func.func @transform_0(%arg0: i32, %arg1: i32) -> (i32, i32) {
    %c1_i32 = arith.constant 1 : i32
    %0 = arith.muli %arg0, %c1_i32 : i32
    %1 = arith.addi %0, %arg1 : i32
    %c0_i32 = arith.constant 0 : i32
    %2 = arith.minsi %1, %c0_i32 : i32
    %c0_i32_0 = arith.constant 0 : i32
    %c0_i32_1 = arith.constant 0 : i32
    return %2, %c0_i32_0 : i32, i32
  }
  func.func @transform_1(%arg0: i32, %arg1: i32) -> (i32, i32) {
    %c1_i32 = arith.constant 1 : i32
    %0 = arith.muli %arg0, %c1_i32 : i32
    %1 = arith.addi %0, %arg1 : i32
    %c0_i32 = arith.constant 0 : i32
    %2 = arith.minsi %1, %c0_i32 : i32
    %c0_i32_0 = arith.constant 0 : i32
    %c0_i32_1 = arith.constant 0 : i32
    return %2, %c0_i32_0 : i32, i32
  }
  func.func @transform_2(%arg0: i32, %arg1: i32) -> (i32, i32) {
    %c0_i32 = arith.constant 0 : i32
    %c0_i32_0 = arith.constant 0 : i32
    return %arg0, %c0_i32 : i32, i32
  }
}

</mosaic_0001>

<llo_original>
// kernel: tpu_custom_call.1
$region0: #{tpu_custom_call.1}
  #allocation0 [shape = 'u32[]', space=smem, size = 0x4, offset = 0x4, fixed_abs, tag = 'smem constant byte address 0x4 - core index']
  #allocation1 [shape = 'u32[144,128]{1,0:T(1,128)}', space=vmem, size = 0x12000, scoped, tag = 'internal scratch']
  #allocation2 [shape = 'f32[8,128]{1,0:T(8,128)}', space=vmem, size = 0x1000, scoped, tag = 'scratch operand']
  %s0 = inlined_call_operand.hbm [shape: f32[16,128], index: 0, kind: input, shape index: {}]
  %s1 = inlined_call_operand.hbm [shape: f32[16,128], index: 1, kind: input, shape index: {}]
  %s2 = inlined_call_operand.hbm [shape: f32[16,128], index: 2, kind: output, shape index: {}]
  %s3 = sld [smem:[#allocation0]]
  $region65: #{tpu_custom_call.1} parent=0
    _
  %s5 = ssub.s32 1, %s3
  %s6 = scalar_select 0, %s5, %s3
  $region1: #{tpu_custom_call.1} parent=0
    #allocation3 [shape = 'u8[16384]{0}', space=vmem, size = 0x4000, scoped, tag = 'input window, operand 0']
    #allocation4 [shape = 's32[2]{0}', space=sflag, size = 0x8, scoped, tag = 'scoped memory for tpu_custom_call.1']
    #allocation5 [shape = 's32[2]{0}', space=sflag, size = 0x8, scoped, tag = 'scoped memory for tpu_custom_call.1']
    #allocation6 [shape = 'u8[16384]{0}', space=vmem, size = 0x4000, scoped, tag = 'input window, operand 1']
    #allocation7 [shape = 's32[2]{0}', space=sflag, size = 0x8, scoped, tag = 'scoped memory for tpu_custom_call.1']
    #allocation8 [shape = 'u8[8192]{0}', space=vmem, size = 0x2000, scoped, tag = 'output window, operand 0']
    %7 = vsyncpa [#allocation4], 0
    %s8 = scalar_lea.sflag [#allocation4], 1
    %9 = vsyncpa %s8, 0
    %10 = vsyncpa [#allocation7], 0
    %s11 = scalar_lea.sflag [#allocation7], 1
    %12 = vsyncpa %s11, 0
    %13 = vsyncpa [#allocation5], 0
    %s14 = scalar_lea.sflag [#allocation5], 1
    %15 = vsyncpa %s14, 0
    loop: start=0, step=1, limit=4
    $region2: #{tpu_custom_call.1} parent=1 // loop_pre_header
      _
    $region3: #{tpu_custom_call.1} parent=1 // loop_header
      %s17 = sphi 0, %s21
      %p18 = scmp.ge.s32.totalorder %s17, 4
      %s24 = sphi 0, %s36
      %s25 = sphi 0, %s32
      %s26 = sphi 0, %s24
      %s27 = sphi 0, %s25
      %s28 = sphi 0, %s26
      %s29 = sphi 0, %s27
      %s45 = sphi 0, %s47
      %s48 = sphi 0, %s45
      %s49 = sphi 0, %s48
      %s65 = sphi 0, %s49
      %s77 = sphi 0, %s79
      %s80 = sphi 0, %s77
      %s81 = sphi 0, %s80
      %s97 = sphi 0, %s81
      %s103 = sphi 0, %s105
      %s106 = sphi 0, %s103
      %s107 = sphi 0, %s106
      %s123 = sphi 0, %s107
    $region4: #{tpu_custom_call.1} parent=1 // loop_header_branch
      %20 = sbr.rel (%p18) target = $region8
    $region5: #{tpu_custom_call.1} parent=1 // loop_body
      %s22 = ssub.s32 %s17, 1
      %s23 = ssub.s32 %s17, 2
      %s30 = sadd.s32 1, %s25
      %p31 = scmp.ge.s32.totalorder %s30, 1
      %s32 = scalar_select %p31, 0, %s30
      %s33 = sadd.s32 1, %s24
      %s34 = scalar_select %p31, %s33, %s24
      %p35 = scmp.ge.s32.totalorder %s34, 2
      %s36 = scalar_select %p35, 0, %s34
      %s37 = sadd.s32 %s24, %s25
      %p38 = scmp.lt.s32.totalorder %s37, 0
      %s39 = scalar_select %p38, %s37, 0
      %s40 = sadd.s32 %s36, %s32
      %p41 = scmp.lt.s32.totalorder %s40, 0
      %s42 = scalar_select %p41, %s40, 0
      %s43 = ssub.s32 %s39, %s42
      %p44 = scmp.eq.s32.totalorder %s43, 0
      %s46 = sadd.s32 %s45, 1
      %s47 = scalar_select %p44, %s45, %s46
      %p50 = pneg %p44
      %p51 = scmp.eq.s32.totalorder %s17, 1
      %p52 = por %p50, %p51
      %p53 = scmp.ne.s32.totalorder %s45, %s48
      %p54 = scmp.eq.s32.totalorder %s17, 0
      %p55 = por %p53, %p54
      %p56 = scmp.ne.s32.totalorder %s45, %s48
      %p57 = scmp.eq.s32.totalorder %s22, 1
      %p58 = por %p56, %p57
      %p59 = scmp.ne.s32.totalorder %s48, %s49
      %p60 = scmp.eq.s32.totalorder %s22, 0
      %p61 = por %p59, %p60
      %p62 = scmp.ne.s32.totalorder %s48, %s49
      %p63 = scmp.eq.s32.totalorder %s23, 1
      %p64 = por %p62, %p63
      %p66 = scmp.ne.s32.totalorder %s49, %s65
      %p67 = scmp.eq.s32.totalorder %s23, 0
      %p68 = por %p66, %p67
      %s69 = sadd.s32 %s24, %s25
      %p70 = scmp.lt.s32.totalorder %s69, 0
      %s71 = scalar_select %p70, %s69, 0
      %s72 = sadd.s32 %s36, %s32
      %p73 = scmp.lt.s32.totalorder %s72, 0
      %s74 = scalar_select %p73, %s72, 0
      %s75 = ssub.s32 %s71, %s74
      %p76 = scmp.eq.s32.totalorder %s75, 0
      %s78 = sadd.s32 %s77, 1
      %s79 = scalar_select %p76, %s77, %s78
      %p82 = pneg %p76
      %p83 = scmp.eq.s32.totalorder %s17, 1
      %p84 = por %p82, %p83
      %p85 = scmp.ne.s32.totalorder %s77, %s80
      %p86 = scmp.eq.s32.totalorder %s17, 0
      %p87 = por %p85, %p86
      %p88 = scmp.ne.s32.totalorder %s77, %s80
      %p89 = scmp.eq.s32.totalorder %s22, 1
      %p90 = por %p88, %p89
      %p91 = scmp.ne.s32.totalorder %s80, %s81
      %p92 = scmp.eq.s32.totalorder %s22, 0
      %p93 = por %p91, %p92
      %p94 = scmp.ne.s32.totalorder %s80, %s81
      %p95 = scmp.eq.s32.totalorder %s23, 1
      %p96 = por %p94, %p95
      %p98 = scmp.ne.s32.totalorder %s81, %s97
      %p99 = scmp.eq.s32.totalorder %s23, 0
      %p100 = por %p98, %p99
      %s101 = ssub.s32 %s24, %s36
      %p102 = scmp.eq.s32.totalorder %s101, 0
      %s104 = sadd.s32 %s103, 1
      %s105 = scalar_select %p102, %s103, %s104
      %p108 = pneg %p102
      %p109 = scmp.eq.s32.totalorder %s17, 1
      %p110 = por %p108, %p109
      %p111 = scmp.ne.s32.totalorder %s103, %s106
      %p112 = scmp.eq.s32.totalorder %s17, 0
      %p113 = por %p111, %p112
      %p114 = scmp.ne.s32.totalorder %s103, %s106
      %p115 = scmp.eq.s32.totalorder %s22, 1
      %p116 = por %p114, %p115
      %p117 = scmp.ne.s32.totalorder %s106, %s107
      %p118 = scmp.eq.s32.totalorder %s22, 0
      %p119 = por %p117, %p118
      %p120 = scmp.ne.s32.totalorder %s106, %s107
      %p121 = scmp.eq.s32.totalorder %s23, 1
      %p122 = por %p120, %p121
      %p124 = scmp.ne.s32.totalorder %s107, %s123
      %p125 = scmp.eq.s32.totalorder %s23, 0
      %p126 = por %p124, %p125
      %p127 = scmp.le.s32.totalorder 1, %s17
      %p128 = scmp.lt.s32.totalorder %s17, 3
      %p129 = pnand %p127, %p128
      %p130 = pneg %p129
      // Predicated region
      $region9: #{tpu_custom_call.1} parent=5 // pred_check
        _
      $region10: #{tpu_custom_call.1} parent=5 // pred_check_branch
        %132 = sbr.rel (%p129) target = $region12
      $region11: #{tpu_custom_call.1} parent=5 // pred_region
        %s133 = ssub.s32 %s17, 1
      $region12: #{tpu_custom_call.1} parent=5 // pred_fallthru
        _
      %p134 = scmp.lt.s32.totalorder %s17, 2
      // Predicated region
      $region13: #{tpu_custom_call.1} parent=5 // pred_check
        %p135 = pneg %p134
      $region14: #{tpu_custom_call.1} parent=5 // pred_check_branch
        %137 = sbr.rel (%p135) target = $region16
      $region15: #{tpu_custom_call.1} parent=5 // pred_region
        // Predicated region
        $region17: #{tpu_custom_call.1} parent=15 // pred_check
          %p138 = pneg %p55
        $region18: #{tpu_custom_call.1} parent=15 // pred_check_branch
          %140 = sbr.rel (%p138) target = $region20
        $region19: #{tpu_custom_call.1} parent=15 // pred_region
          %s141 = sand.u32 %s45, 1
          %s142 = scalar_lea.sflag [#allocation4], %s141
          %s143 = sand.u32 %s45, 1
          %s144 = smul.addr %s143, 16
          %s145 = scalar_lea.vmem [#allocation3], %s144
          %s146 = sadd.s32 %s24, %s25
          %p147 = scmp.lt.s32.totalorder %s146, 0
          %s148 = scalar_select %p147, %s146, 0
          %s149 = smul.u32 2, %s148
          %s151 = ssub.s32 256, 256
          %152 = vsyncadd %s142, %s151
          %s153 = smul.addr %s149, 128
          %s154 = scalar_lea.hbm %s0, %s153
          %s155 = sshll.u32 %s145, 4
          %s156 = int_to_ptr.vmem [resolvable:$true] %s155
          %161 = dma.hbm_to_vmem [thread:$0]  %s154, 256, %s156, %s142, 128, 128, 8
        $region20: #{tpu_custom_call.1} parent=15 // pred_fallthru
          _
        // Predicated region
        $region21: #{tpu_custom_call.1} parent=15 // pred_check
          %p162 = pneg %p87
        $region22: #{tpu_custom_call.1} parent=15 // pred_check_branch
          %164 = sbr.rel (%p162) target = $region24
        $region23: #{tpu_custom_call.1} parent=15 // pred_region
          %s165 = sand.u32 %s77, 1
          %s166 = scalar_lea.sflag [#allocation7], %s165
          %s167 = sand.u32 %s77, 1
          %s168 = smul.addr %s167, 16
          %s169 = scalar_lea.vmem [#allocation6], %s168
          %s170 = sadd.s32 %s24, %s25
          %p171 = scmp.lt.s32.totalorder %s170, 0
          %s172 = scalar_select %p171, %s170, 0
          %s173 = smul.u32 2, %s172
          %s175 = ssub.s32 256, 256
          %176 = vsyncadd %s166, %s175
          %s177 = smul.addr %s173, 128
          %s178 = scalar_lea.hbm %s1, %s177
          %s179 = sshll.u32 %s169, 4
          %s180 = int_to_ptr.vmem [resolvable:$true] %s179
          %185 = dma.hbm_to_vmem [thread:$0]  %s178, 256, %s180, %s166, 128, 128, 8
        $region24: #{tpu_custom_call.1} parent=15 // pred_fallthru
          _
      $region16: #{tpu_custom_call.1} parent=5 // pred_fallthru
        _
      %p186 = scmp.le.s32.totalorder 1, %s17
      %p187 = scmp.lt.s32.totalorder %s17, 3
      %p188 = pnand %p186, %p187
      %p189 = pneg %p188
      // Predicated region
      $region25: #{tpu_custom_call.1} parent=5 // pred_check
        _
      $region26: #{tpu_custom_call.1} parent=5 // pred_check_branch
        %191 = sbr.rel (%p188) target = $region28
      $region27: #{tpu_custom_call.1} parent=5 // pred_region
        %s192 = ssub.s32 %s17, 1
        %s193 = sand.u32 %s48, 1
        %s194 = scalar_lea.sflag [#allocation4], %s193
        %s195 = sand.u32 %s48, 1
        %s196 = smul.addr %s195, 16
        %s197 = scalar_lea.vmem [#allocation3], %s196
        // Predicated region
        $region29: #{tpu_custom_call.1} parent=27 // pred_check
          %p198 = pneg %p61
        $region30: #{tpu_custom_call.1} parent=27 // pred_check_branch
          %200 = sbr.rel (%p198) target = $region32
        $region31: #{tpu_custom_call.1} parent=27 // pred_region
          %201 = dma.done %s194, 256
        $region32: #{tpu_custom_call.1} parent=27 // pred_fallthru
          _
        %s202 = sand.u32 %s80, 1
        %s203 = scalar_lea.sflag [#allocation7], %s202
        %s204 = sand.u32 %s80, 1
        %s205 = smul.addr %s204, 16
        %s206 = scalar_lea.vmem [#allocation6], %s205
        // Predicated region
        $region33: #{tpu_custom_call.1} parent=27 // pred_check
          %p207 = pneg %p93
        $region34: #{tpu_custom_call.1} parent=27 // pred_check_branch
          %209 = sbr.rel (%p207) target = $region36
        $region35: #{tpu_custom_call.1} parent=27 // pred_region
          %210 = dma.done %s203, 256
        $region36: #{tpu_custom_call.1} parent=27 // pred_fallthru
          _
        %s211 = sand.u32 %s48, 1
        %s212 = scalar_lea.sflag [#allocation4], %s211
        %s213 = sand.u32 %s48, 1
        %s214 = smul.addr %s213, 16
        %s215 = scalar_lea.vmem [#allocation3], %s214
        %p216 = pneg %p61
        %p217 = pneg %p58
        %s218 = sand.u32 %s80, 1
        %s219 = scalar_lea.sflag [#allocation7], %s218
        %s220 = sand.u32 %s80, 1
        %s221 = smul.addr %s220, 16
        %s222 = scalar_lea.vmem [#allocation6], %s221
        %p223 = pneg %p93
        %p224 = pneg %p90
        %p225 = pneg %p119
        %p226 = pneg %p116
        %s227 = sand.u32 %s106, 1
        %s228 = scalar_lea.sflag [#allocation5], %s227
        %s229 = sand.u32 %s106, 1
        %s230 = smul.addr %s229, 8
        %s231 = scalar_lea.vmem [#allocation8], %s230
        %s232 = sadd.s32 %s26, %s27
        %p233 = scmp.lt.s32.totalorder %s232, 0
        %s234 = scalar_select %p233, %s232, 0
        %s235 = smul.u32 2, %s234
        %s236 = sadd.s32 %s26, %s27
        %p237 = scmp.lt.s32.totalorder %s236, 0
        %s238 = scalar_select %p237, %s236, 0
        %s239 = smul.u32 2, %s238
        %p240 = scmp.eq.s32.totalorder %s27, 0
        // Predicated region
        $region37: #{tpu_custom_call.1} parent=27 // pred_check
          %p241 = pneg %p240
        $region38: #{tpu_custom_call.1} parent=27 // pred_check_branch
          %243 = sbr.rel (%p241) target = $region40
        $region39: #{tpu_custom_call.1} parent=27 // pred_region
          %244 = vst [vmem:[#allocation2] sm:$0xff] 0.0
        $region40: #{tpu_custom_call.1} parent=27 // pred_fallthru
          _
        %s245 = sadd.s32 %s26, %s27
        %s246 = smul.u32 %s245, 16
        %v247 = vld [vmem:[%s197] sm:$0xff]
        %v248 = vld [vmem:[%s197 + $0x8] sm:$0xff]
        %v249 = vld [vmem:[%s206] sm:$0xff]
        %v250 = vld [vmem:[%s206 + $0x8] sm:$0xff]
        %v251 = vsub.f32 %v247, %v249
        %v252 = vsub.f32 %v248, %v250
        %v253 = vand.u32 2147483647, %v251
        %v254 = vand.u32 2147483647, %v252
        %v255 = vsub.f32 360.0, %v253
        %v256 = vsub.f32 360.0, %v254
        %v257 = vmin.f32 %v253, %v255
        %v258 = vmin.f32 %v254, %v256
        %s259 = sadd.s32 %s246, 16
        %p260 = scmp.gt.s32.totalorder %s259, 16
        %p261 = scmp.le.s32.totalorder %s259, 16
        // Predicated region
        $region41: #{tpu_custom_call.1} parent=27 // pred_check
          %p262 = pneg %p261
        $region42: #{tpu_custom_call.1} parent=27 // pred_check_branch
          %264 = sbr.rel (%p262) target = $region44
        $region43: #{tpu_custom_call.1} parent=27 // pred_region
          %v265 = vld [vmem:[#allocation2] sm:$0xff]
          %v266 = vadd.f32 %v257, %v258
          %v267 = vadd.f32 %v265, %v266
          %268 = vst [vmem:[#allocation2] sm:$0xff] %v267
        $region44: #{tpu_custom_call.1} parent=27 // pred_fallthru
          _
        // Predicated region
        $region45: #{tpu_custom_call.1} parent=27 // pred_check
          %p269 = pneg %p260
        $region46: #{tpu_custom_call.1} parent=27 // pred_check_branch
          %271 = sbr.rel (%p269) target = $region48
        $region47: #{tpu_custom_call.1} parent=27 // pred_region
          %s272 = ssub.s32 16, %s246
          %v273 = vlaneseq
          %v274 = vshrl.u32 %v273, 7
          %v275 = vadd.s32 %v274, 8
          %v276 = vstv %s272
          %vm277 = vcmp.lt.s32.totalorder %v274, %v276
          %vm278 = vcmp.lt.s32.totalorder %v275, %v276
          %v279 = vsel %vm277, %v257, 0.0
          %v280 = vsel %vm278, %v258, 0.0
          %v281 = vld [vmem:[#allocation2] sm:$0xff]
          %v282 = vadd.f32 %v279, %v280
          %v283 = vadd.f32 %v281, %v282
          %284 = vst [vmem:[#allocation2] sm:$0xff] %v283
        $region48: #{tpu_custom_call.1} parent=27 // pred_fallthru
          _
        // Predicated region
        $region49: #{tpu_custom_call.1} parent=27 // pred_check
          %p285 = pneg %p240
        $region50: #{tpu_custom_call.1} parent=27 // pred_check_branch
          %287 = sbr.rel (%p285) target = $region52
        $region51: #{tpu_custom_call.1} parent=27 // pred_region
          %v288 = vld [vmem:[#allocation2] sm:$0xff]
          %289 = vst [vmem:[%s231] sm:$0xff] %v288
        $region52: #{tpu_custom_call.1} parent=27 // pred_fallthru
          _
        %s290 = sand.u32 %s106, 1
        %s291 = scalar_lea.sflag [#allocation5], %s290
        %s292 = sand.u32 %s106, 1
        %s293 = smul.addr %s292, 8
        %s294 = scalar_lea.vmem [#allocation8], %s293
        // Predicated region
        $region53: #{tpu_custom_call.1} parent=27 // pred_check
          %p295 = pneg %p116
        $region54: #{tpu_custom_call.1} parent=27 // pred_check_branch
          %297 = sbr.rel (%p295) target = $region56
        $region55: #{tpu_custom_call.1} parent=27 // pred_region
          %s299 = ssub.s32 128, 128
          %300 = vsyncadd %s291, %s299
          %s301 = smul.addr %s26, 128
          %s302 = scalar_lea.hbm %s2, %s301
          %s304 = sshll.u32 %s294, 4
          %s305 = int_to_ptr.vmem [resolvable:$true] %s304
          %307 = dma.vmem_to_hbm [thread:$0]  %s305, 128, %s302, %s291
        $region56: #{tpu_custom_call.1} parent=27 // pred_fallthru
          _
      $region28: #{tpu_custom_call.1} parent=5 // pred_fallthru
        _
      %p308 = scmp.le.s32.totalorder 2, %s17
      // Predicated region
      $region57: #{tpu_custom_call.1} parent=5 // pred_check
        %p309 = pneg %p308
      $region58: #{tpu_custom_call.1} parent=5 // pred_check_branch
        %311 = sbr.rel (%p309) target = $region60
      $region59: #{tpu_custom_call.1} parent=5 // pred_region
        %s312 = ssub.s32 %s17, 2
        // Predicated region
        $region61: #{tpu_custom_call.1} parent=59 // pred_check
          %p313 = pneg %p122
        $region62: #{tpu_custom_call.1} parent=59 // pred_check_branch
          %315 = sbr.rel (%p313) target = $region64
        $region63: #{tpu_custom_call.1} parent=59 // pred_region
          %s316 = sand.u32 %s107, 1
          %s317 = scalar_lea.sflag [#allocation5], %s316
          %s318 = sand.u32 %s107, 1
          %s319 = smul.addr %s318, 8
          %s320 = scalar_lea.vmem [#allocation8], %s319
          %321 = dma.done %s317, 128
        $region64: #{tpu_custom_call.1} parent=59 // pred_fallthru
          _
      $region60: #{tpu_custom_call.1} parent=5 // pred_fallthru
        _
    $region6: #{tpu_custom_call.1} parent=1 // loop_footer
      %s21 = sadd.s32 1, %s17
    $region7: #{tpu_custom_call.1} parent=1 // loop_footer_branch
      %16 = sbr.rel target = $region3
    $region8: #{tpu_custom_call.1} parent=1 // loop_exit
      _
    %322 = vsyncpa [#allocation4], 1
    %s323 = scalar_lea.sflag [#allocation4], 1
    %324 = vsyncpa %s323, 1
    %325 = vsyncpa [#allocation7], 1
    %s326 = scalar_lea.sflag [#allocation7], 1
    %327 = vsyncpa %s326, 1
    %328 = vsyncpa [#allocation5], 1
    %s329 = scalar_lea.sflag [#allocation5], 1
    %330 = vsyncpa %s329, 1

</llo_original>
